<compile_context>
chip_gen: v7x
topology: tpu7x:2x2x1
jax: 0.10.0
libtpu: 0.0.40
codegen_flags: <defaults>
</compile_context>

<pallas_src>
import jax
import jax.numpy as jnp
from jax.experimental import pallas as pl
from jax.experimental.pallas import tpu as pltpu


def _round_up(x: int, m: int) -> int:
    return (x + m - 1) // m * m


# --------------------------------------------------------------------------- #
# Kernels
# --------------------------------------------------------------------------- #
def _ce_soft_kernel(logits_ref, target_ref, out_ref):
    """Soft (distribution) targets: loss_i = (m+lse)*sum(t) - sum(t*x)."""
    x = logits_ref[...].astype(jnp.float32)   # (tb, C)
    t = target_ref[...].astype(jnp.float32)   # (tb, C)

    m = jnp.max(x, axis=-1, keepdims=True)                              # (tb, 1)
    lse = jnp.log(jnp.sum(jnp.exp(x - m), axis=-1, keepdims=True))      # (tb, 1)

    t_sum = jnp.sum(t, axis=-1, keepdims=True)                          # (tb, 1)
    tx_sum = jnp.sum(t * x, axis=-1, keepdims=True)                     # (tb, 1)
    row_loss = (m + lse) * t_sum - tx_sum                               # (tb, 1)

    out_ref[...] = row_loss.reshape(1, -1).astype(out_ref.dtype)        # (1, tb)


def _ce_label_kernel(labels_ref, logits_ref, out_ref):
    """Integer class-index targets: loss_i = (m+lse) - x[i, label_i]."""
    x = logits_ref[...].astype(jnp.float32)                             # (tb, C)
    labels = labels_ref[...]                                            # (tb, 1) int32

    m = jnp.max(x, axis=-1, keepdims=True)                              # (tb, 1)
    lse = jnp.log(jnp.sum(jnp.exp(x - m), axis=-1, keepdims=True))      # (tb, 1)

    col = jax.lax.broadcasted_iota(jnp.int32, x.shape, dimension=1)     # (tb, C)
    x_at_label = jnp.sum(jnp.where(col == labels, x, 0.0),
                         axis=-1, keepdims=True)                        # (tb, 1)
    row_loss = (m + lse) - x_at_label                                   # (tb, 1)

    out_ref[...] = row_loss.reshape(1, -1).astype(out_ref.dtype)        # (1, tb)


# --------------------------------------------------------------------------- #
# Tiling / VMEM sizing
# --------------------------------------------------------------------------- #
def _default_vmem_limit_bytes() -> int:
    """Generation-aware scoped-VMEM limit (~5/8 of physical, capped at 96 MiB)."""
    try:
        phys = pltpu.get_tpu_info().vmem_capacity_bytes
        return int(min(max(phys * 5 // 8, 16 << 20), 96 << 20))
    except Exception:
        return 40 << 20   # safe everywhere (v7x per-TC VMEM is 64 MiB)


def _pick_row_tile(B: int, C: int, logit_bytes: int, target_bytes: int,
                   vmem_limit_bytes: int):
    """Row tile for full-C blocks.

    Budget per row (lane-padded): double-buffered inputs (2x each) plus ~4
    f32 (tb, Cpad) intermediates, fitting within ~80% of the scoped limit.
    Returns (tb, n_tiles) with tb a multiple of 8 and B padded to n_tiles*tb.
    """
    Cpad = _round_up(C, 128)
    per_row = (2 * Cpad * (logit_bytes + target_bytes)   # pipelined inputs
               + 4 * Cpad * 4)                           # f32 intermediates
    budget = int(vmem_limit_bytes * 0.8)
    cap = max(8, budget // max(per_row, 1))

    tb = max(8, min(cap // 8 * 8, 1024))          # 512-1024 rows ~ HBM roofline
    tb = min(tb, _round_up(B, 8))
    n_tiles = -(-B // tb)

    # v7x megacore: prefer an even number of grid steps so both TCs stay busy.
    if n_tiles > 1 and n_tiles % 2 == 1:
        tb_even = _round_up(-(-B // (n_tiles + 1)), 8)
        if tb_even >= 8:
            tb = tb_even
            n_tiles = -(-B // tb)
    return tb, n_tiles


# --------------------------------------------------------------------------- #
# Wrapper
# --------------------------------------------------------------------------- #
def cross_entropy_vec_targets(
    logits: jax.Array,
    target: jax.Array,
    *,
    reduction: str = "mean",
    vmem_limit_bytes: int | None = None,
    cast_target_to_logits_dtype: bool = False,
) -> jax.Array:
    """Pallas implementation of CrossEntropyLossVecTargets.forward."""
    assert logits.ndim == 2, "logits must be (batch, n_classes)"
    B, C = logits.shape
    if vmem_limit_bytes is None:
        vmem_limit_bytes = _default_vmem_limit_bytes()

    logit_bytes = jnp.dtype(logits.dtype).itemsize
    int_labels = not jnp.issubdtype(target.dtype, jnp.floating)

    if int_labels:
        assert target.shape == (B,)
        target_bytes = 0   # labels are 4 bytes/row, negligible vs C floats
    else:
        assert target.shape == (B, C)
        if cast_target_to_logits_dtype and target.dtype != logits.dtype:
            # probabilities in [0,1]: bf16 storage halves the target HBM read
            target = target.astype(logits.dtype)
        target_bytes = jnp.dtype(target.dtype).itemsize

    tb, n_tiles = _pick_row_tile(B, C, logit_bytes, target_bytes, vmem_limit_bytes)
    Bpad = n_tiles * tb

    if Bpad != B:
        logits = jnp.pad(logits, ((0, Bpad - B), (0, 0)))
        if int_labels:
            target = jnp.pad(target, ((0, Bpad - B),))
        else:
            target = jnp.pad(target, ((0, Bpad - B), (0, 0)))

    compiler_params = pltpu.CompilerParams(
        dimension_semantics=("parallel",),
        vmem_limit_bytes=vmem_limit_bytes,
    )
    out_shape = jax.ShapeDtypeStruct((n_tiles, tb), jnp.float32)
    out_spec = pl.BlockSpec((1, tb), lambda i: (i, 0))          # lane-dense rows
    logits_spec = pl.BlockSpec((tb, C), lambda i: (i, 0))

    if int_labels:
        labels = target.astype(jnp.int32).reshape(Bpad, 1)
        cost = pl.CostEstimate(
            flops=6 * Bpad * C,
            transcendentals=Bpad * C + Bpad,
            bytes_accessed=Bpad * C * logit_bytes + 8 * Bpad,
        )
        per_row = pl.pallas_call(
            _ce_label_kernel,
            out_shape=out_shape,
            grid=(n_tiles,),
            in_specs=[
                pl.BlockSpec((tb, 1), lambda i: (i, 0)),   # labels
                logits_spec,
            ],
            out_specs=out_spec,
            compiler_params=compiler_params,
            cost_estimate=cost,
        )(labels, logits)
    else:
        cost = pl.CostEstimate(
            flops=8 * Bpad * C,
            transcendentals=Bpad * C + Bpad,
            bytes_accessed=Bpad * C * (logit_bytes + target_bytes) + 4 * Bpad,
        )
        per_row = pl.pallas_call(
            _ce_soft_kernel,
            out_shape=out_shape,
            grid=(n_tiles,),
            in_specs=[logits_spec, pl.BlockSpec((tb, C), lambda i: (i, 0))],
            out_specs=out_spec,
            compiler_params=compiler_params,
            cost_estimate=cost,
        )(logits, target)

    per_row = per_row.reshape(Bpad)[:B]

    if reduction in ("mean", "batchmean"):   # batchmean == mean over the (B,) vector
        return jnp.mean(per_row)
    if reduction == "sum":
        return jnp.sum(per_row)
    if reduction in ("none", "identity"):
        return per_row
    raise ValueError(f"Unknown reduction {reduction!r}")


# --------------------------------------------------------------------------- #
# Self-test
# --------------------------------------------------------------------------- #
if __name__ == "__main__":
    key = jax.random.PRNGKey(0)
    k_logits, k_tgt, k_lbl, k_l2, k_t2 = jax.random.split(key, 5)

    # --- soft (distribution) targets, f32 -------------------------------- #
    B, C = 8, 32
    logits = jax.random.normal(k_logits, (B, C), dtype=jnp.float32)
    target = jax.nn.softmax(
        jax.random.normal(k_tgt, (B, C), dtype=jnp.float32), axis=-1
    )
    out = jax.block_until_ready(cross_entropy_vec_targets(logits, target))
    ref_logprobs = jax.nn.log_softmax(logits, axis=-1)
    ref = jnp.mean(-jnp.sum(ref_logprobs * target, axis=-1))
    assert out.shape == ()
    assert jnp.allclose(out, ref, rtol=1e-5, atol=1e-5), (out, ref)

    # --- integer class-index targets (in-kernel label selection) --------- #
    labels = jax.random.randint(k_lbl, (B,), 0, C)
    out_int = jax.block_until_ready(cross_entropy_vec_targets(logits, labels))
    ref_int = jnp.mean(
        -jnp.take_along_axis(ref_logprobs, labels[:, None], axis=-1)[:, 0]
    )
    assert jnp.allclose(out_int, ref_int, rtol=1e-5, atol=1e-5), (out_int, ref_int)

    # --- bf16, non-multiple-of-128 C, non-multiple-of-8 B (padding path) - #
    B2, C2 = 10, 40
    logits2 = jax.random.normal(k_l2, (B2, C2), dtype=jnp.float32).astype(jnp.bfloat16)
    target2 = jax.nn.softmax(
        jax.random.normal(k_t2, (B2, C2), dtype=jnp.float32), axis=-1
    ).astype(jnp.bfloat16)
    out2 = jax.block_until_ready(
        cross_entropy_vec_targets(logits2, target2, reduction="none")
    )
    lg32 = logits2.astype(jnp.float32)
    tg32 = target2.astype(jnp.float32)
    ref2 = -jnp.sum(jax.nn.log_softmax(lg32, axis=-1) * tg32, axis=-1)
    assert out2.shape == (B2,)
    assert jnp.allclose(out2, ref2, rtol=1e-4, atol=1e-4), (out2, ref2)

    print("KERNEL_OK")
</pallas_src>

<mosaic_0001>
module attributes {stable_mosaic.version = 11 : i64} {
  func.func @_ce_soft_kernel(%arg0: i32, %arg1: memref<8x32xf32, #tpu.memory_space<vmem>>, %arg2: memref<8x32xf32, #tpu.memory_space<vmem>>, %arg3: memref<1x8xf32, #tpu.memory_space<vmem>>) attributes {dimension_semantics = [#tpu.dimension_semantics<parallel>], iteration_bounds = array<i64: 1>, scalar_prefetch = 0 : i64, scratch_operands = 0 : i64, tpu.core_type = #tpu.core_type<tc>, window_params = [{transform_indices = @transform_0, window_bounds = array<i64: 8, 32>}, {transform_indices = @transform_1, window_bounds = array<i64: 8, 32>}, {transform_indices = @transform_2, window_bounds = array<i64: 1, 8>}]} {
    %c0 = arith.constant 0 : index
    %c0_0 = arith.constant 0 : index
    %0 = vector.load %arg1[%c0, %c0_0] : memref<8x32xf32, #tpu.memory_space<vmem>>, vector<8x32xf32>
    %c0_1 = arith.constant 0 : index
    %c0_2 = arith.constant 0 : index
    %1 = vector.load %arg2[%c0_1, %c0_2] : memref<8x32xf32, #tpu.memory_space<vmem>>, vector<8x32xf32>
    %cst = arith.constant dense<0xFF800000> : vector<8xf32>
    %2 = vector.multi_reduction <maximumf>, %0, %cst [1] : vector<8x32xf32> to vector<8xf32>
    %3 = vector.shape_cast %2 : vector<8xf32> to vector<8x1xf32>
    %4 = vector.broadcast %3 : vector<8x1xf32> to vector<8x32xf32>
    %5 = arith.subf %0, %4 : vector<8x32xf32>
    %6 = math.exp %5 : vector<8x32xf32>
    %cst_3 = arith.constant dense<0.000000e+00> : vector<8xf32>
    %7 = vector.multi_reduction <add>, %6, %cst_3 [1] : vector<8x32xf32> to vector<8xf32>
    %8 = vector.shape_cast %7 : vector<8xf32> to vector<8x1xf32>
    %9 = math.log %8 : vector<8x1xf32>
    %cst_4 = arith.constant dense<0.000000e+00> : vector<8xf32>
    %10 = vector.multi_reduction <add>, %1, %cst_4 [1] : vector<8x32xf32> to vector<8xf32>
    %11 = vector.shape_cast %10 : vector<8xf32> to vector<8x1xf32>
    %12 = arith.mulf %1, %0 : vector<8x32xf32>
    %cst_5 = arith.constant dense<0.000000e+00> : vector<8xf32>
    %13 = vector.multi_reduction <add>, %12, %cst_5 [1] : vector<8x32xf32> to vector<8xf32>
    %14 = vector.shape_cast %13 : vector<8xf32> to vector<8x1xf32>
    %15 = arith.addf %3, %9 : vector<8x1xf32>
    %16 = arith.mulf %15, %11 : vector<8x1xf32>
    %17 = arith.subf %16, %14 : vector<8x1xf32>
    %18 = vector.shape_cast %17 : vector<8x1xf32> to vector<1x8xf32>
    %c0_6 = arith.constant 0 : index
    %c0_7 = arith.constant 0 : index
    %19 = vector.load %arg3[%c0_6, %c0_7] : memref<1x8xf32, #tpu.memory_space<vmem>>, vector<1x8xf32>
    tpu.vector_store %arg3[%c0_6, %c0_7], %18 {strides = array<i32>} : memref<1x8xf32, #tpu.memory_space<vmem>>, vector<1x8xf32>,
    return
  }
  func.func @transform_0(%arg0: i32) -> (i32, i32) {
    %c0_i32 = arith.constant 0 : i32
    %c0_i32_0 = arith.constant 0 : i32
    return %arg0, %c0_i32 : i32, i32
  }
  func.func @transform_1(%arg0: i32) -> (i32, i32) {
    %c0_i32 = arith.constant 0 : i32
    %c0_i32_0 = arith.constant 0 : i32
    return %arg0, %c0_i32 : i32, i32
  }
  func.func @transform_2(%arg0: i32) -> (i32, i32) {
    %c0_i32 = arith.constant 0 : i32
    %c0_i32_0 = arith.constant 0 : i32
    return %arg0, %c0_i32 : i32, i32
  }
}

</mosaic_0001>

<llo_original>
// kernel: tpu_custom_call.1
$region0: #{tpu_custom_call.1}
  #allocation0 [shape = 'u32[]', space=smem, size = 0x4, offset = 0x4, fixed_abs, tag = 'smem constant byte address 0x4 - core index']
  #allocation1 [shape = 'u32[144,128]{1,0:T(1,128)}', space=vmem, size = 0x12000, scoped, tag = 'internal scratch']
  %s0 = inlined_call_operand.hbm [shape: f32[8,32], index: 0, kind: input, shape index: {}]
  %s1 = inlined_call_operand.hbm [shape: f32[8,32], index: 1, kind: input, shape index: {}]
  %s2 = inlined_call_operand.hbm [shape: f32[1,8], index: 2, kind: output, shape index: {}]
  %s3 = sld [smem:[#allocation0]]
  $region26: #{tpu_custom_call.1} parent=0
    _
  %s5 = ssub.s32 1, %s3
  %s6 = scalar_select 0, %s5, %s3
  $region1: #{tpu_custom_call.1} parent=0
    #allocation2 [shape = 'u8[4096]{0}', space=vmem, size = 0x1000, scoped, tag = 'input window, operand 0, single buffered']
    #allocation3 [shape = 's32[1]{0}', space=sflag, size = 0x4, scoped, tag = 'scoped memory for tpu_custom_call.1']
    #allocation4 [shape = 's32[1]{0}', space=sflag, size = 0x4, scoped, tag = 'scoped memory for tpu_custom_call.1']
    #allocation5 [shape = 'u8[4096]{0}', space=vmem, size = 0x1000, scoped, tag = 'input window, operand 1, single buffered']
    #allocation6 [shape = 's32[1]{0}', space=sflag, size = 0x4, scoped, tag = 'scoped memory for tpu_custom_call.1']
    #allocation7 [shape = 'u8[512]{0}', space=vmem, size = 0x400, scoped, tag = 'output window, operand 0, single buffered']
    %7 = vsyncpa [#allocation3], 0
    %8 = vsyncpa [#allocation6], 0
    %9 = vsyncpa [#allocation4], 0
    // Predicated region
    $region2: #{tpu_custom_call.1} parent=1 // pred_check
      _
    $region3: #{tpu_custom_call.1} parent=1 // pred_check_branch
      %11 = sbr.rel (0) target = $region5
    $region4: #{tpu_custom_call.1} parent=1 // pred_region
      %s13 = ssub.s32 128, 128
      %14 = vsyncadd [#allocation3], %s13
      %s16 = sshll.u32 [#allocation2], 4
      %s17 = int_to_ptr.vmem [resolvable:$true] %s16
      %19 = dma.hbm_to_vmem [thread:$0]  %s0, 128, %s17, [#allocation3]
    $region5: #{tpu_custom_call.1} parent=1 // pred_fallthru
      _
    // Predicated region
    $region6: #{tpu_custom_call.1} parent=1 // pred_check
      _
    $region7: #{tpu_custom_call.1} parent=1 // pred_check_branch
      %21 = sbr.rel (0) target = $region9
    $region8: #{tpu_custom_call.1} parent=1 // pred_region
      %s23 = ssub.s32 128, 128
      %24 = vsyncadd [#allocation6], %s23
      %s26 = sshll.u32 [#allocation5], 4
      %s27 = int_to_ptr.vmem [resolvable:$true] %s26
      %29 = dma.hbm_to_vmem [thread:$0]  %s1, 128, %s27, [#allocation6]
    $region9: #{tpu_custom_call.1} parent=1 // pred_fallthru
      _
    // Predicated region
    $region10: #{tpu_custom_call.1} parent=1 // pred_check
      _
    $region11: #{tpu_custom_call.1} parent=1 // pred_check_branch
      %31 = sbr.rel (0) target = $region13
    $region12: #{tpu_custom_call.1} parent=1 // pred_region
      %32 = dma.done [#allocation3], 128
    $region13: #{tpu_custom_call.1} parent=1 // pred_fallthru
      _
    // Predicated region
    $region14: #{tpu_custom_call.1} parent=1 // pred_check
      _
    $region15: #{tpu_custom_call.1} parent=1 // pred_check_branch
      %34 = sbr.rel (0) target = $region17
    $region16: #{tpu_custom_call.1} parent=1 // pred_region
      %35 = dma.done [#allocation6], 128
    $region17: #{tpu_custom_call.1} parent=1 // pred_fallthru
      _
    %v36 = vld [vmem:[#allocation2] sm:$0xff]
    %v37 = vld [vmem:[#allocation5] sm:$0xff]
    %vm38 = vcmask 261120
    %v39 = vsel %vm38, %v36, -inf
    %40 = vmax.xlane.f32.xlu0 %v39
    %v41 = vpop.xlane.xlu0 %40
    %v42 = vsub.f32 %v36, %v41
    %v43 = vmul.f32 %v42, 1.442695
    %v44 = vpow.pop %v43
    %v45 = vsel %vm38, %v44, 0.0
    %46 = vadd.xlane.f32.xlu0 %v45
    %v47 = vpop.xlane.xlu0 %46
    %v48 = vlog2.pop %v47
    %v49 = vmul.f32 %v48, 0.6931472
    %v50 = vsel %vm38, %v37, 0.0
    %51 = vadd.xlane.f32.xlu0 %v50
    %v52 = vpop.xlane.xlu0 %51
    %v53 = vmul.f32 %v37, %v36
    %v54 = vsel %vm38, %v53, 0.0
    %55 = vadd.xlane.f32.xlu0 %v54
    %v56 = vpop.xlane.xlu0 %55
    %v57 = vadd.f32 %v41, %v49
    %v58 = vmul.f32 %v57, %v52
    %v59 = vsub.f32 %v58, %v56
    %v61 = vlaneseq
    %v62 = vand.u32 %v61, 127
    %v63 = vlaneseq
    %v64 = vshrl.u32 %v63, 7
    %v65 = vsub.s32 %v62, %v64
    %v66 = vrot.slane %v59, %v65
    %vm68 = vcmask 57344
    %69 = vst.msk [vmem:[#allocation7] sm:$0x1] %vm68, %v66
    // Predicated region
    $region18: #{tpu_custom_call.1} parent=1 // pred_check
      _
    $region19: #{tpu_custom_call.1} parent=1 // pred_check_branch
      %71 = sbr.rel (0) target = $region21
    $region20: #{tpu_custom_call.1} parent=1 // pred_region
      %s73 = ssub.s32 16, 16
      %74 = vsyncadd [#allocation4], %s73
      %s76 = sshll.u32 [#allocation7], 4
      %s77 = int_to_ptr.vmem [resolvable:$true] %s76
      %79 = dma.vmem_to_hbm [thread:$0]  %s77, 16, %s2, [#allocation4]
    $region21: #{tpu_custom_call.1} parent=1 // pred_fallthru
      _
    // Predicated region
    $region22: #{tpu_custom_call.1} parent=1 // pred_check
      _
    $region23: #{tpu_custom_call.1} parent=1 // pred_check_branch
      %81 = sbr.rel (0) target = $region25
    $region24: #{tpu_custom_call.1} parent=1 // pred_region
      %82 = dma.done [#allocation4], 16
    $region25: #{tpu_custom_call.1} parent=1 // pred_fallthru
      _
    %83 = vsyncpa [#allocation3], 1
    %84 = vsyncpa [#allocation6], 1
    %85 = vsyncpa [#allocation4], 1

</llo_original>
